<compile_context>
chip_gen: v7x
topology: tpu7x:2x2x1
jax: 0.10.0
libtpu: 0.0.40
codegen_flags: <defaults>
</compile_context>

<pallas_src>
import functools

import jax
import jax.numpy as jnp
from jax.experimental import pallas as pl
from jax.experimental.pallas import tpu as pltpu


# ----------------------------------------------------------------------------
# Tiled linear kernel (used for the conv im2col matmuls)
# ----------------------------------------------------------------------------
def _linear_kernel(x_ref, w_ref, b_ref, o_ref, *, relu):
    y = jnp.dot(x_ref[...], w_ref[...], preferred_element_type=jnp.float32)
    y = y + b_ref[...]
    if relu:
        y = jnp.maximum(y, 0.0)
    o_ref[...] = y.astype(o_ref.dtype)


def _choose_tm(M, cap=512):
    """Largest multiple-of-8 divisor of M that is <= cap (falls back to full M)."""
    if M <= cap:
        return M
    t = (cap // 8) * 8
    while t >= 8:
        if M % t == 0:
            return t
        t -= 8
    return M


def pallas_linear(x, w, b, *, relu=False):
    """y = x @ w + b (optionally ReLU).  x:(M,K), w:(K,N), b:(1,N).  M-tiled, parallel grid."""
    M, K = x.shape
    N = w.shape[1]
    tm = _choose_tm(M)
    return pl.pallas_call(
        functools.partial(_linear_kernel, relu=relu),
        grid=(M // tm,),
        in_specs=[
            pl.BlockSpec((tm, K), lambda i: (i, 0)),
            pl.BlockSpec((K, N), lambda i: (0, 0)),
            pl.BlockSpec((1, N), lambda i: (0, 0)),
        ],
        out_specs=pl.BlockSpec((tm, N), lambda i: (i, 0)),
        out_shape=jax.ShapeDtypeStruct((M, N), jnp.float32),
        compiler_params=pltpu.CompilerParams(
            dimension_semantics=("parallel",),
            vmem_limit_bytes=32 * 1024 * 1024),
    )(x, w, b)


# ----------------------------------------------------------------------------
# Fused post-CNN core kernel: inputFC -> LSTM (gate-fused) -> outputFC -> heads
# ----------------------------------------------------------------------------
def _make_core_kernel(n_in_fc, n_lstm, n_out_fc, T, B, H):
    f32 = jnp.float32

    def kernel(*refs):
        it = iter(refs)
        x_ref = next(it)                 # (T*B, F0)  time-major rows
        h0_ref = next(it)                # (L, B, H)
        c0_ref = next(it)                # (L, B, H)
        in_fc = [(next(it), next(it)) for _ in range(n_in_fc)]
        lstm = [(next(it), next(it), next(it)) for _ in range(n_lstm)]
        out_fc = [(next(it), next(it)) for _ in range(n_out_fc)]
        wh_ref = next(it)                # (lastDim, 2*pred)
        bh_ref = next(it)                # (1, 2*pred)
        o_ref = next(it)                 # (T, B, 2*pred)
        hN_ref = next(it)                # (L, B, H)
        cN_ref = next(it)                # (L, B, H)

        # ---- input FC stack, batched over all T*B rows ----
        x = x_ref[...]
        for (w_ref, b_ref) in in_fc:
            x = jnp.maximum(
                jnp.dot(x, w_ref[...], preferred_element_type=f32) + b_ref[...], 0.0)

        # ---- LSTM layers: fused gates (4H = lane-dense), layer-0 input proj hoisted ----
        hs = None
        for l, (wih_ref, whh_ref, bl_ref) in enumerate(lstm):
            wih = wih_ref[...]
            whh = whh_ref[...]
            bl = bl_ref[...]
            if l == 0:
                xp = jnp.dot(x, wih, preferred_element_type=f32) + bl   # (T*B, 4H)
            h = h0_ref[l]
            c = c0_ref[l]
            new_hs = []
            for t in range(T):
                if l == 0:
                    g_in = xp[t * B:(t + 1) * B, :]
                else:
                    g_in = jnp.dot(hs[t], wih, preferred_element_type=f32) + bl
                g = g_in + jnp.dot(h, whh, preferred_element_type=f32)  # (B, 4H)
                i_g = jax.nn.sigmoid(g[:, 0:H])
                f_g = jax.nn.sigmoid(g[:, H:2 * H])
                g_g = jnp.tanh(g[:, 2 * H:3 * H])
                o_g = jax.nn.sigmoid(g[:, 3 * H:4 * H])
                c = f_g * c + i_g * g_g
                h = o_g * jnp.tanh(c)
                new_hs.append(h)
            hN_ref[l] = h
            cN_ref[l] = c
            hs = new_hs

        # ---- output FC stack + fused mean/logVar heads (per timestep, no HBM roundtrip) ----
        out_ws = [(w_ref[...], b_ref[...]) for (w_ref, b_ref) in out_fc]
        wh = wh_ref[...]
        bh = bh_ref[...]
        for t in range(T):
            z = hs[t]
            for (w, b) in out_ws:
                z = jnp.maximum(jnp.dot(z, w, preferred_element_type=f32) + b, 0.0)
            o_ref[t] = (jnp.dot(z, wh, preferred_element_type=f32) + bh).astype(o_ref.dtype)

    return kernel


def pallas_core(params, x2d, h0s, c0s, T, B):
    H = params['hidden']
    L = params['num_layers']
    heads_w, heads_b = params['heads']
    n_heads = heads_w.shape[1]

    def fullspec(shape):
        nd = len(shape)
        return pl.BlockSpec(shape, lambda i: (0,) * nd)

    inputs = [x2d, h0s, c0s]
    for (w, b) in params['inputFC']:
        inputs += [w, b]
    for lp in params['lstm']:
        inputs += [lp['w_ih'], lp['w_hh'], lp['b']]
    for (w, b) in params['outputFC']:
        inputs += [w, b]
    inputs += [heads_w, heads_b]

    in_specs = [fullspec(a.shape) for a in inputs]
    out_shape = (jax.ShapeDtypeStruct((T, B, n_heads), jnp.float32),
                 jax.ShapeDtypeStruct((L, B, H), jnp.float32),
                 jax.ShapeDtypeStruct((L, B, H), jnp.float32))
    out_specs = (fullspec((T, B, n_heads)), fullspec((L, B, H)), fullspec((L, B, H)))

    kernel = _make_core_kernel(len(params['inputFC']), L, len(params['outputFC']), T, B, H)
    return pl.pallas_call(
        kernel,
        grid=(1,),
        in_specs=in_specs,
        out_specs=out_specs,
        out_shape=out_shape,
        compiler_params=pltpu.CompilerParams(
            dimension_semantics=("arbitrary",),
            vmem_limit_bytes=32 * 1024 * 1024),
    )(*inputs)


# ----------------------------------------------------------------------------
# Glue: NHWC im2col for Conv2d (valid padding, stride)
# ----------------------------------------------------------------------------
def im2col_nhwc(x, kh, kw, sh, sw):
    """x: (N, H, W, C) -> patches (N*OH*OW, kh*kw*C), feature order (kh, kw, C)."""
    N, H, W, C = x.shape
    OH = (H - kh) // sh + 1
    OW = (W - kw) // sw + 1
    patches = []
    for i in range(kh):
        for j in range(kw):
            patches.append(x[:, i:i + sh * OH:sh, j:j + sw * OW:sw, :])  # (N,OH,OW,C)
    p = jnp.stack(patches, axis=3)                 # (N, OH, OW, kh*kw, C)
    p = p.reshape(N * OH * OW, kh * kw * C)
    return p, OH, OW


# ----------------------------------------------------------------------------
# Parameter init (deterministic, PyTorch-style uniform bounds; weights pre-packed)
# ----------------------------------------------------------------------------
def init_params(key, mp):
    stateDim = mp['ioDim']['stateDim']
    actionDim = mp['ioDim']['actionDim']
    predDim = mp['ioDim']['predictionDim']
    C, H, W = mp['ioDim']['sensingDim']

    def uni(k, shape, fan_in):
        bound = 1.0 / float(fan_in) ** 0.5
        return jax.random.uniform(k, shape, jnp.float32, -bound, bound)

    cnn = []
    for (oc, kh, kw, sh, sw) in mp['networkSize']['CNNSize']:
        key, k1, k2 = jax.random.split(key, 3)
        fan_in = C * kh * kw
        w = uni(k1, (oc, C, kh, kw), fan_in)
        b = uni(k2, (oc,), fan_in)
        # NHWC im2col layout: rows ordered (kh, kw, C); stored once as (kh*kw*C, oc)
        w_mat = jnp.transpose(w, (2, 3, 1, 0)).reshape(kh * kw * C, oc)
        cnn.append(dict(w=w_mat, b=b.reshape(1, oc), kh=kh, kw=kw, sh=sh, sw=sw))
        C = oc
        H = (H - kh) // sh + 1
        W = (W - kw) // sw + 1
    lastDim = C * H * W + stateDim + actionDim

    def lin(k, in_d, out_d):
        k1, k2 = jax.random.split(k)
        w = uni(k1, (out_d, in_d), in_d)                     # PyTorch layout
        b = uni(k2, (out_d,), in_d)
        return (jnp.asarray(w.T), b.reshape(1, out_d))       # stored (in,out), (1,out)

    inputFC = []
    for d in mp['networkSize']['inputFCsize']:
        key, k = jax.random.split(key)
        inputFC.append(lin(k, lastDim, d))
        lastDim = d

    num_layers, hidden = mp['networkSize']['lstmSize']
    lstm = []
    in_d = lastDim
    for _ in range(num_layers):
        key, k1, k2, k3, k4 = jax.random.split(key, 5)
        w_ih = uni(k1, (4 * hidden, in_d), hidden)
        w_hh = uni(k2, (4 * hidden, hidden), hidden)
        b_ih = uni(k3, (4 * hidden,), hidden)
        b_hh = uni(k4, (4 * hidden,), hidden)
        lstm.append(dict(w_ih=jnp.asarray(w_ih.T),                      # (in, 4H), cols i,f,g,o
                         w_hh=jnp.asarray(w_hh.T),                      # (H, 4H)
                         b=(b_ih + b_hh).reshape(1, 4 * hidden)))       # combined bias
        in_d = hidden
    lastDim = hidden

    outputFC = []
    for d in mp['networkSize']['outputFCsize']:
        key, k = jax.random.split(key)
        outputFC.append(lin(k, lastDim, d))
        lastDim = d

    key, k1, k2 = jax.random.split(key, 3)
    wm, bm = lin(k1, lastDim, predDim)
    wv, bv = lin(k2, lastDim, predDim)
    heads_w = jnp.concatenate([wm, wv], axis=1)              # (lastDim, 2*pred)
    heads_b = jnp.concatenate([bm, bv], axis=1)              # (1, 2*pred)

    return dict(cnn=cnn, inputFC=inputFC, lstm=lstm, outputFC=outputFC,
                heads=(heads_w, heads_b), hidden=hidden, num_layers=num_layers,
                predDim=predDim)


# ----------------------------------------------------------------------------
# Forward pass (mirrors probDynModel.forward with dropoutVals=1, p=0.0)
# ----------------------------------------------------------------------------
def prob_dyn_model_forward(params, rState, rSense, rAction, hidden=None):
    B, T = rState.shape[:2]
    C, Hs, Ws = rSense.shape[-3:]

    # --- CNN: NHWC im2col + tiled Pallas matmul, ReLU fused ---
    x = rSense.reshape(-1, C, Hs, Ws).transpose(0, 2, 3, 1)          # (B*T, H, W, C)
    for layer in params['cnn']:
        patches, OH, OW = im2col_nhwc(x, layer['kh'], layer['kw'], layer['sh'], layer['sw'])
        y = pallas_linear(patches, layer['w'], layer['b'], relu=True)
        x = y.reshape(x.shape[0], OH, OW, layer['w'].shape[1])       # NHWC, no transpose
    # channel-major flatten to match torch's NCHW .reshape
    sense_flat = x.transpose(0, 3, 1, 2).reshape(B, T, -1)

    connected = jnp.concatenate([sense_flat, rState, rAction], axis=-1)   # (B, T, F0)

    # dropout p=0.0 -> all-ones masks; the identity multiply is skipped entirely.
    newDropoutVals = [jnp.ones((B, w.shape[1]), jnp.float32) for (w, _) in params['inputFC']]

    H = params['hidden']
    L = params['num_layers']
    if hidden is None:
        h0s = jnp.zeros((L, B, H), jnp.float32)
        c0s = jnp.zeros((L, B, H), jnp.float32)
    else:
        h0s, c0s = hidden

    # time-major rows (t, b) for the fused core kernel
    x2d = connected.transpose(1, 0, 2).reshape(T * B, -1)

    y_tb, hN, cN = pallas_core(params, x2d, h0s, c0s, T, B)
    y = y_tb.transpose(1, 0, 2)                                      # (B, T, 2*pred)
    predDim = params['predDim']
    mean = y[..., :predDim]
    logVar = y[..., predDim:]
    return mean, logVar, (hN, cN), newDropoutVals


# ----------------------------------------------------------------------------
if __name__ == "__main__":
    model_params = {
        'ioDim': {'stateDim': 6, 'sensingDim': (4, 16, 16),
                  'actionDim': 4, 'predictionDim': 6},
        'networkSize': {'CNNSize': [[8, 3, 3, 2, 2], [16, 3, 3, 2, 2]],
                        'inputFCsize': [32],
                        'lstmSize': [1, 32],
                        'outputFCsize': [32]},
        'trainParams': {'dropout': 0.0},
    }

    key = jax.random.PRNGKey(0)
    kp, ks, kse, ka = jax.random.split(key, 4)
    params = init_params(kp, model_params)

    B, T = 2, 8
    rState = jax.random.normal(ks, (B, T, model_params['ioDim']['stateDim']), jnp.float32)
    rSense = jax.random.normal(kse, (B, T) + tuple(model_params['ioDim']['sensingDim']),
                               jnp.float32)
    rAction = jax.random.normal(ka, (B, T, model_params['ioDim']['actionDim']), jnp.float32)

    mean, logVar, hidden, dvals = prob_dyn_model_forward(params, rState, rSense, rAction)
    jax.block_until_ready((mean, logVar, hidden))

    predDim = model_params['ioDim']['predictionDim']
    assert mean.shape == (B, T, predDim)
    assert logVar.shape == (B, T, predDim)
    assert hidden[0].shape == (1, B, 32) and hidden[1].shape == (1, B, 32)
    assert len(dvals) == 1 and dvals[0].shape == (B, 32)
    assert bool(jnp.all(jnp.isfinite(mean))) and bool(jnp.all(jnp.isfinite(logVar)))
    print("KERNEL_OK")
</pallas_src>

<mosaic_0001>
module attributes {stable_mosaic.version = 11 : i64} {
  func.func @_linear_kernel(%arg0: i32, %arg1: memref<392x36xf32, #tpu.memory_space<vmem>>, %arg2: memref<36x8xf32, #tpu.memory_space<vmem>>, %arg3: memref<1x8xf32, #tpu.memory_space<vmem>>, %arg4: memref<392x8xf32, #tpu.memory_space<vmem>>) attributes {dimension_semantics = [#tpu.dimension_semantics<parallel>], iteration_bounds = array<i64: 2>, scalar_prefetch = 0 : i64, scratch_operands = 0 : i64, tpu.core_type = #tpu.core_type<tc>, window_params = [{transform_indices = @transform_0, window_bounds = array<i64: 392, 36>}, {pipeline_mode = #tpu.pipeline_mode<synchronous>, transform_indices = @transform_1, window_bounds = array<i64: 36, 8>}, {pipeline_mode = #tpu.pipeline_mode<synchronous>, transform_indices = @transform_2, window_bounds = array<i64: 1, 8>}, {transform_indices = @transform_3, window_bounds = array<i64: 392, 8>}]} {
    %c0 = arith.constant 0 : index
    %c0_0 = arith.constant 0 : index
    %0 = vector.load %arg1[%c0, %c0_0] : memref<392x36xf32, #tpu.memory_space<vmem>>, vector<392x36xf32>
    %c0_1 = arith.constant 0 : index
    %c0_2 = arith.constant 0 : index
    %1 = vector.load %arg2[%c0_1, %c0_2] : memref<36x8xf32, #tpu.memory_space<vmem>>, vector<36x8xf32>
    %cst = arith.constant dense<0.000000e+00> : vector<392x8xf32>
    %2 = tpu.matmul %0, %1, %cst {dimension_numbers = #tpu.dot_dimension_numbers<[1], [0], [0], [1], [0, 0, 1, 1], [], []>} : vector<392x36xf32>, vector<36x8xf32>, vector<392x8xf32> -> vector<392x8xf32>
    %c0_3 = arith.constant 0 : index
    %c0_4 = arith.constant 0 : index
    %3 = vector.load %arg3[%c0_3, %c0_4] : memref<1x8xf32, #tpu.memory_space<vmem>>, vector<1x8xf32>
    %4 = vector.broadcast %3 : vector<1x8xf32> to vector<392x8xf32>
    %5 = arith.addf %2, %4 : vector<392x8xf32>
    %cst_5 = arith.constant 0.000000e+00 : f32
    %6 = vector.broadcast %cst_5 : f32 to vector<392x8xf32>
    %7 = arith.maximumf %5, %6 : vector<392x8xf32>
    %c0_6 = arith.constant 0 : index
    %c0_7 = arith.constant 0 : index
    %8 = vector.load %arg4[%c0_6, %c0_7] : memref<392x8xf32, #tpu.memory_space<vmem>>, vector<392x8xf32>
    tpu.vector_store %arg4[%c0_6, %c0_7], %7 {strides = array<i32>} : memref<392x8xf32, #tpu.memory_space<vmem>>, vector<392x8xf32>,
    return
  }
  func.func @transform_0(%arg0: i32) -> (i32, i32) {
    %c0_i32 = arith.constant 0 : i32
    %c0_i32_0 = arith.constant 0 : i32
    return %arg0, %c0_i32 : i32, i32
  }
  func.func @transform_1(%arg0: i32) -> (i32, i32) {
    %c0_i32 = arith.constant 0 : i32
    %c0_i32_0 = arith.constant 0 : i32
    %c0_i32_1 = arith.constant 0 : i32
    return %c0_i32, %c0_i32_0 : i32, i32
  }
  func.func @transform_2(%arg0: i32) -> (i32, i32) {
    %c0_i32 = arith.constant 0 : i32
    %c0_i32_0 = arith.constant 0 : i32
    %c0_i32_1 = arith.constant 0 : i32
    return %c0_i32, %c0_i32_0 : i32, i32
  }
  func.func @transform_3(%arg0: i32) -> (i32, i32) {
    %c0_i32 = arith.constant 0 : i32
    %c0_i32_0 = arith.constant 0 : i32
    return %arg0, %c0_i32 : i32, i32
  }
}

</mosaic_0001>

<llo_original>
// kernel: tpu_custom_call.1
$region0: #{tpu_custom_call.1}
  #allocation0 [shape = 'u32[]', space=smem, size = 0x4, offset = 0x4, fixed_abs, tag = 'smem constant byte address 0x4 - core index']
  #allocation1 [shape = 'u32[144,128]{1,0:T(1,128)}', space=vmem, size = 0x12000, scoped, tag = 'internal scratch']
  %s0 = inlined_call_operand.vmem [shape: f32[784,36], index: 0, kind: input, shape index: {}]
  %s1 = inlined_call_operand.vmem [shape: f32[36,8], index: 1, kind: input, shape index: {}]
  %s2 = inlined_call_operand.vmem [shape: f32[1,8], index: 2, kind: input, shape index: {}]
  %s3 = inlined_call_operand.vmem [shape: f32[784,8], index: 3, kind: output, shape index: {}]
  %s4 = sld [smem:[#allocation0]]
  $region45: #{tpu_custom_call.1} parent=0
    _
  %s6 = ssub.s32 1, %s4
  %s7 = scalar_select 0, %s6, %s4
  loop: start=0, step=1, limit=4
  $region2: #{tpu_custom_call.1} parent=0 // loop_pre_header
    _
  $region3: #{tpu_custom_call.1} parent=0 // loop_header
    %s9 = sphi 0, %s13
    %p10 = scmp.ge.s32.totalorder %s9, 4
    %s19 = sphi 0, %s21
    %s22 = sphi 0, %s19
    %s23 = sphi 0, %s22
    %s39 = sphi 0, %s23
    %s43 = sphi 0, %s43
    %s45 = sphi 0, %s43
    %s46 = sphi 0, %s45
    %s60 = sphi 0, %s46
    %s64 = sphi 0, %s64
    %s66 = sphi 0, %s64
    %s67 = sphi 0, %s66
    %s81 = sphi 0, %s67
    %s87 = sphi 0, %s89
    %s90 = sphi 0, %s87
    %s91 = sphi 0, %s90
    %s107 = sphi 0, %s91
  $region4: #{tpu_custom_call.1} parent=0 // loop_header_branch
    %12 = sbr.rel (%p10) target = $region8
  $region5: #{tpu_custom_call.1} parent=0 // loop_body
    %s14 = ssub.s32 %s9, 1
    %s15 = ssub.s32 %s9, 2
    %s16 = sadd.s32 %s9, 1
    %s17 = ssub.s32 %s9, %s16
    %p18 = scmp.eq.s32.totalorder %s17, 0
    %s20 = sadd.s32 %s19, 1
    %s21 = scalar_select %p18, %s19, %s20
    %p24 = pneg %p18
    %p25 = scmp.eq.s32.totalorder %s9, 1
    %p26 = por %p24, %p25
    %p27 = scmp.ne.s32.totalorder %s19, %s22
    %p28 = scmp.eq.s32.totalorder %s9, 0
    %p29 = por %p27, %p28
    %p30 = scmp.ne.s32.totalorder %s19, %s22
    %p31 = scmp.eq.s32.totalorder %s14, 1
    %p32 = por %p30, %p31
    %p33 = scmp.ne.s32.totalorder %s22, %s23
    %p34 = scmp.eq.s32.totalorder %s14, 0
    %p35 = por %p33, %p34
    %p36 = scmp.ne.s32.totalorder %s22, %s23
    %p37 = scmp.eq.s32.totalorder %s15, 1
    %p38 = por %p36, %p37
    %p40 = scmp.ne.s32.totalorder %s23, %s39
    %p41 = scmp.eq.s32.totalorder %s15, 0
    %p42 = por %p40, %p41
    %s44 = sadd.s32 %s43, 1
    %p47 = scmp.eq.s32.totalorder %s9, 1
    %p48 = scmp.ne.s32.totalorder %s43, %s45
    %p49 = scmp.eq.s32.totalorder %s9, 0
    %p50 = por %p48, %p49
    %p51 = scmp.ne.s32.totalorder %s43, %s45
    %p52 = scmp.eq.s32.totalorder %s14, 1
    %p53 = por %p51, %p52
    %p54 = scmp.ne.s32.totalorder %s45, %s46
    %p55 = scmp.eq.s32.totalorder %s14, 0
    %p56 = por %p54, %p55
    %p57 = scmp.ne.s32.totalorder %s45, %s46
    %p58 = scmp.eq.s32.totalorder %s15, 1
    %p59 = por %p57, %p58
    %p61 = scmp.ne.s32.totalorder %s46, %s60
    %p62 = scmp.eq.s32.totalorder %s15, 0
    %p63 = por %p61, %p62
    %s65 = sadd.s32 %s64, 1
    %p68 = scmp.eq.s32.totalorder %s9, 1
    %p69 = scmp.ne.s32.totalorder %s64, %s66
    %p70 = scmp.eq.s32.totalorder %s9, 0
    %p71 = por %p69, %p70
    %p72 = scmp.ne.s32.totalorder %s64, %s66
    %p73 = scmp.eq.s32.totalorder %s14, 1
    %p74 = por %p72, %p73
    %p75 = scmp.ne.s32.totalorder %s66, %s67
    %p76 = scmp.eq.s32.totalorder %s14, 0
    %p77 = por %p75, %p76
    %p78 = scmp.ne.s32.totalorder %s66, %s67
    %p79 = scmp.eq.s32.totalorder %s15, 1
    %p80 = por %p78, %p79
    %p82 = scmp.ne.s32.totalorder %s67, %s81
    %p83 = scmp.eq.s32.totalorder %s15, 0
    %p84 = por %p82, %p83
    %s85 = ssub.s32 %s9, %s16
    %p86 = scmp.eq.s32.totalorder %s85, 0
    %s88 = sadd.s32 %s87, 1
    %s89 = scalar_select %p86, %s87, %s88
    %p92 = pneg %p86
    %p93 = scmp.eq.s32.totalorder %s9, 1
    %p94 = por %p92, %p93
    %p95 = scmp.ne.s32.totalorder %s87, %s90
    %p96 = scmp.eq.s32.totalorder %s9, 0
    %p97 = por %p95, %p96
    %p98 = scmp.ne.s32.totalorder %s87, %s90
    %p99 = scmp.eq.s32.totalorder %s14, 1
    %p100 = por %p98, %p99
    %p101 = scmp.ne.s32.totalorder %s90, %s91
    %p102 = scmp.eq.s32.totalorder %s14, 0
    %p103 = por %p101, %p102
    %p104 = scmp.ne.s32.totalorder %s90, %s91
    %p105 = scmp.eq.s32.totalorder %s15, 1
    %p106 = por %p104, %p105
    %p108 = scmp.ne.s32.totalorder %s91, %s107
    %p109 = scmp.eq.s32.totalorder %s15, 0
    %p110 = por %p108, %p109
    %p111 = scmp.le.s32.totalorder 1, %s9
    %p112 = scmp.lt.s32.totalorder %s9, 3
    %p113 = pnand %p111, %p112
    %p114 = pneg %p113
    // Predicated region
    $region9: #{tpu_custom_call.1} parent=5 // pred_check
      _
    $region10: #{tpu_custom_call.1} parent=5 // pred_check_branch
      %116 = sbr.rel (%p113) target = $region12
    $region11: #{tpu_custom_call.1} parent=5 // pred_region
      %s117 = ssub.s32 %s9, 1
      // Predicated region
      $region13: #{tpu_custom_call.1} parent=11 // pred_check
        %p118 = pneg %p56
      $region14: #{tpu_custom_call.1} parent=11 // pred_check_branch
        %120 = sbr.rel (%p118) target = $region16
      $region15: #{tpu_custom_call.1} parent=11 // pred_region
        _
      $region16: #{tpu_custom_call.1} parent=11 // pred_fallthru
        _
      // Predicated region
      $region17: #{tpu_custom_call.1} parent=11 // pred_check
        %p121 = pneg %p77
      $region18: #{tpu_custom_call.1} parent=11 // pred_check_branch
        %123 = sbr.rel (%p121) target = $region20
      $region19: #{tpu_custom_call.1} parent=11 // pred_region
        _
      $region20: #{tpu_custom_call.1} parent=11 // pred_fallthru
        _
    $region12: #{tpu_custom_call.1} parent=5 // pred_fallthru
      _
    %p124 = scmp.lt.s32.totalorder %s9, 2
    // Predicated region
    $region21: #{tpu_custom_call.1} parent=5 // pred_check
      %p125 = pneg %p124
    $region22: #{tpu_custom_call.1} parent=5 // pred_check_branch
      %127 = sbr.rel (%p125) target = $region24
    $region23: #{tpu_custom_call.1} parent=5 // pred_region
      // Predicated region
      $region25: #{tpu_custom_call.1} parent=23 // pred_check
        %p128 = pneg %p29
      $region26: #{tpu_custom_call.1} parent=23 // pred_check_branch
        %130 = sbr.rel (%p128) target = $region28
      $region27: #{tpu_custom_call.1} parent=23 // pred_region
        %s131 = smul.u32 49, %s9
        %p132 = scmp.lt.s32.totalorder %s131, 97
        %s133 = scalar_select %p132, %s131, 97
        %s134 = smul.addr %s133, 8
        %s135 = scalar_lea.vmem %s0, %s134
        %s136 = smul.u32 49, %s9
      $region28: #{tpu_custom_call.1} parent=23 // pred_fallthru
        _
    $region24: #{tpu_custom_call.1} parent=5 // pred_fallthru
      _
    %p137 = scmp.le.s32.totalorder 1, %s9
    %p138 = scmp.lt.s32.totalorder %s9, 3
    %p139 = pnand %p137, %p138
    %p140 = pneg %p139
    // Predicated region
    $region29: #{tpu_custom_call.1} parent=5 // pred_check
      _
    $region30: #{tpu_custom_call.1} parent=5 // pred_check_branch
      %142 = sbr.rel (%p139) target = $region32
    $region31: #{tpu_custom_call.1} parent=5 // pred_region
      %s143 = ssub.s32 %s9, 1
      %s144 = smul.u32 49, %s14
      %p145 = scmp.lt.s32.totalorder %s144, 97
      %s146 = scalar_select %p145, %s144, 97
      %s147 = smul.addr %s146, 8
      %s148 = scalar_lea.vmem %s0, %s147
      %p149 = pneg %p35
      %p150 = pneg %p32
      %p151 = pneg %p56
      %p152 = pneg %p53
      %p153 = pneg %p77
      %p154 = pneg %p74
      %p155 = pneg %p103
      %p156 = pneg %p100
      %s157 = smul.u32 49, %s14
      %p158 = scmp.lt.s32.totalorder %s157, 97
      %s159 = scalar_select %p158, %s157, 97
      %s160 = smul.addr %s159, 8
      %s161 = scalar_lea.vmem %s3, %s160
      %s162 = smul.u32 49, %s14
      %p163 = scmp.lt.s32.totalorder %s162, 97
      %s164 = scalar_select %p163, %s162, 97
      %s165 = smul.addr %s164, 8
      %s166 = scalar_lea.vmem %s0, %s165
      %s167 = smul.u32 49, %s14
      %s168 = smul.u32 49, %s14
      %p169 = scmp.lt.s32.totalorder %s168, 97
      %s170 = scalar_select %p169, %s168, 97
      %s171 = smul.addr %s170, 8
      %s172 = scalar_lea.vmem %s3, %s171
      %s173 = smul.u32 49, %s14
      %v174 = vld [vmem:[%s166] sm:$0xff]
      %v175 = vld [vmem:[%s166 + $0x8] sm:$0xff]
      %v176 = vld [vmem:[%s166 + $0x10] sm:$0xff]
      %v177 = vld [vmem:[%s166 + $0x18] sm:$0xff]
      %v178 = vld [vmem:[%s166 + $0x20] sm:$0xff]
      %v179 = vld [vmem:[%s166 + $0x28] sm:$0xff]
      %v180 = vld [vmem:[%s166 + $0x30] sm:$0xff]
      %v181 = vld [vmem:[%s166 + $0x38] sm:$0xff]
      %v182 = vld [vmem:[%s166 + $0x40] sm:$0xff]
      %v183 = vld [vmem:[%s166 + $0x48] sm:$0xff]
      %v184 = vld [vmem:[%s166 + $0x50] sm:$0xff]
      %v185 = vld [vmem:[%s166 + $0x58] sm:$0xff]
      %v186 = vld [vmem:[%s166 + $0x60] sm:$0xff]
      %v187 = vld [vmem:[%s166 + $0x68] sm:$0xff]
      %v188 = vld [vmem:[%s166 + $0x70] sm:$0xff]
      %v189 = vld [vmem:[%s166 + $0x78] sm:$0xff]
      %v190 = vld [vmem:[%s166 + $0x80] sm:$0xff]
      %v191 = vld [vmem:[%s166 + $0x88] sm:$0xff]
      %v192 = vld [vmem:[%s166 + $0x90] sm:$0xff]
      %v193 = vld [vmem:[%s166 + $0x98] sm:$0xff]
      %v194 = vld [vmem:[%s166 + $0xa0] sm:$0xff]
      %v195 = vld [vmem:[%s166 + $0xa8] sm:$0xff]
      %v196 = vld [vmem:[%s166 + $0xb0] sm:$0xff]
      %v197 = vld [vmem:[%s166 + $0xb8] sm:$0xff]
      %v198 = vld [vmem:[%s166 + $0xc0] sm:$0xff]
      %v199 = vld [vmem:[%s166 + $0xc8] sm:$0xff]
      %v200 = vld [vmem:[%s166 + $0xd0] sm:$0xff]
      %v201 = vld [vmem:[%s166 + $0xd8] sm:$0xff]
      %v202 = vld [vmem:[%s166 + $0xe0] sm:$0xff]
      %v203 = vld [vmem:[%s166 + $0xe8] sm:$0xff]
      %v204 = vld [vmem:[%s166 + $0xf0] sm:$0xff]
      %v205 = vld [vmem:[%s166 + $0xf8] sm:$0xff]
      %v206 = vld [vmem:[%s166 + $0x100] sm:$0xff]
      %v207 = vld [vmem:[%s166 + $0x108] sm:$0xff]
      %v208 = vld [vmem:[%s166 + $0x110] sm:$0xff]
      %v209 = vld [vmem:[%s166 + $0x118] sm:$0xff]
      %v210 = vld [vmem:[%s166 + $0x120] sm:$0xff]
      %v211 = vld [vmem:[%s166 + $0x128] sm:$0xff]
      %v212 = vld [vmem:[%s166 + $0x130] sm:$0xff]
      %v213 = vld [vmem:[%s166 + $0x138] sm:$0xff]
      %v214 = vld [vmem:[%s166 + $0x140] sm:$0xff]
      %v215 = vld [vmem:[%s166 + $0x148] sm:$0xff]
      %v216 = vld [vmem:[%s166 + $0x150] sm:$0xff]
      %v217 = vld [vmem:[%s166 + $0x158] sm:$0xff]
      %v218 = vld [vmem:[%s166 + $0x160] sm:$0xff]
      %v219 = vld [vmem:[%s166 + $0x168] sm:$0xff]
      %v220 = vld [vmem:[%s166 + $0x170] sm:$0xff]
      %v221 = vld [vmem:[%s166 + $0x178] sm:$0xff]
      %v222 = vld [vmem:[%s166 + $0x180] sm:$0xff]
      %v223 = vld [vmem:[%s1] sm:$0xff]
      %v224 = vld [vmem:[%s1 + $0x8] sm:$0xff]
      %v225 = vld [vmem:[%s1 + $0x10] sm:$0xff]
      %v226 = vld [vmem:[%s1 + $0x18] sm:$0xff]
      %v227 = vld [vmem:[%s1 + $0x20] sm:$0xf]
      %v228 = vld [vmem:[%s2] sm:$0x1]
      %v230 = vlaneseq
      %v231 = vshrl.u32 %v230, 7
      %v232 = vsub.s32 0, %v231
      %v233 = vrot.slane %v228, %v232
      %vm235 = vcmask 293888
      %v237 = vsel %vm235, %v174, 0
      %v240 = vsel %vm235, %v175, 0
      %v243 = vsel %vm235, %v176, 0
      %v246 = vsel %vm235, %v177, 0
      %v249 = vsel %vm235, %v178, 0
      %v252 = vsel %vm235, %v179, 0
      %v255 = vsel %vm235, %v180, 0
      %v258 = vsel %vm235, %v181, 0
      %v261 = vsel %vm235, %v182, 0
      %v264 = vsel %vm235, %v183, 0
      %v267 = vsel %vm235, %v184, 0
      %v270 = vsel %vm235, %v185, 0
      %v273 = vsel %vm235, %v186, 0
      %v276 = vsel %vm235, %v187, 0
      %v279 = vsel %vm235, %v188, 0
      %v282 = vsel %vm235, %v189, 0
      %v285 = vsel %vm235, %v190, 0
      %v288 = vsel %vm235, %v191, 0
      %v291 = vsel %vm235, %v192, 0
      %v294 = vsel %vm235, %v193, 0
      %v297 = vsel %vm235, %v194, 0
      %v300 = vsel %vm235, %v195, 0
      %v303 = vsel %vm235, %v196, 0
      %v306 = vsel %vm235, %v197, 0
      %v309 = vsel %vm235, %v198, 0
      %v312 = vsel %vm235, %v199, 0
      %v315 = vsel %vm235, %v200, 0
      %v318 = vsel %vm235, %v201, 0
      %v321 = vsel %vm235, %v202, 0
      %v324 = vsel %vm235, %v203, 0
      %v327 = vsel %vm235, %v204, 0
      %v330 = vsel %vm235, %v205, 0
      %v333 = vsel %vm235, %v206, 0
      %v336 = vsel %vm235, %v207, 0
      %v339 = vsel %vm235, %v208, 0
      %v342 = vsel %vm235, %v209, 0
      %v345 = vsel %vm235, %v210, 0
      %v348 = vsel %vm235, %v211, 0
      %v351 = vsel %vm235, %v212, 0
      %v354 = vsel %vm235, %v213, 0
      %v357 = vsel %vm235, %v214, 0
      %v360 = vsel %vm235, %v215, 0
      %v363 = vsel %vm235, %v216, 0
      %v366 = vsel %vm235, %v217, 0
      %v369 = vsel %vm235, %v218, 0
      %v372 = vsel %vm235, %v219, 0
      %v375 = vsel %vm235, %v220, 0
      %v378 = vsel %vm235, %v221, 0
      %v381 = vsel %vm235, %v222, 0
      %vm383 = vcmask 1043456
      %v385 = vsel %vm383, %v227, 0
      %387 = vmatprep.subr.mxu0 0.0
      %388 = vmatpush1.msra.mxu0 %v223
      %389 = vmatprep.subr.mxu0 0.0
      %390 = vmatpush1.msra.mxu0 %v224
      %391 = vmatprep.subr.mxu0 0.0
      %392 = vmatpush1.msra.mxu0 %v225
      %393 = vmatprep.subr.mxu0 0.0
      %394 = vmatpush1.msra.mxu0 %v226
      %395 = vmatprep.subr.mxu0 0.0
      %396 = vmatpush1.msra.mxu0 %v385
      %397 = vmatprep.subr.mxu0 0.0
      %398 = vmatpush1.msra.mxu0 0.0
      %399 = vmatprep.subr.mxu0 0.0
      %400 = vmatpush1.msra.mxu0 0.0
      %401 = vmatprep.subr.mxu0 0.0
      %402 = vmatpush1.msra.mxu0 0.0
      %403 = vmatprep.subr.mxu0 0.0
      %404 = vmatpush1.msra.mxu0 0.0
      %405 = vmatprep.subr.mxu0 0.0
      %406 = vmatpush1.msra.mxu0 0.0
      %407 = vmatprep.subr.mxu0 0.0
      %408 = vmatpush1.msra.mxu0 0.0
      %409 = vmatprep.subr.mxu0 0.0
      %410 = vmatpush1.msra.mxu0 0.0
      %411 = vmatprep.subr.mxu0 0.0
      %412 = vmatpush1.msra.mxu0 0.0
      %413 = vmatprep.subr.mxu0 0.0
      %414 = vmatpush1.msra.mxu0 0.0
      %415 = vmatprep.subr.mxu0 0.0
      %416 = vmatpush1.msra.mxu0 0.0
      %417 = vmatprep.subr.mxu0 0.0
      %418 = vmatpush1.msra.mxu0 0.0
      %419 = vmatprep.subr.mxu0 0.0
      %420 = vmatpush1.msra.mxu0 0.0
      %421 = vmatprep.subr.mxu0 0.0
      %422 = vmatpush1.msra.mxu0 0.0
      %423 = vmatprep.subr.mxu0 0.0
      %424 = vmatpush1.msra.mxu0 0.0
      %425 = vmatprep.subr.mxu0 0.0
      %426 = vmatpush1.msra.mxu0 0.0
      %427 = vmatprep.subr.mxu0 0.0
      %428 = vmatpush1.msra.mxu0 0.0
      %429 = vmatprep.subr.mxu0 0.0
      %430 = vmatpush1.msra.mxu0 0.0
      %431 = vmatprep.subr.mxu0 0.0
      %432 = vmatpush1.msra.mxu0 0.0
      %433 = vmatprep.subr.mxu0 0.0
      %434 = vmatpush1.msra.mxu0 0.0
      %435 = vmatprep.subr.mxu0 0.0
      %436 = vmatpush1.msra.mxu0 0.0
      %437 = vmatprep.subr.mxu0 0.0
      %438 = vmatpush1.msra.mxu0 0.0
      %439 = vmatprep.subr.mxu0 0.0
      %440 = vmatpush1.msra.mxu0 0.0
      %441 = vmatprep.subr.mxu0 0.0
      %442 = vmatpush1.msra.mxu0 0.0
      %443 = vmatprep.subr.mxu0 0.0
      %444 = vmatpush1.msra.mxu0 0.0
      %445 = vmatprep.subr.mxu0 0.0
      %446 = vmatpush1.msra.mxu0 0.0
      %447 = vmatprep.subr.mxu0 0.0
      %448 = vmatpush1.msra.mxu0 0.0
      %449 = vmatprep.subr.mxu0 0.0
      %450 = vmatpush1.msra.mxu0 0.0
      %451 = vmatprep.mubr.f32.mxu0 0.0
      %452 = vmatmul.mubr.f32.gmra.mrb[0].mxu0 %v237
      %v453 = vpop.f32.mrb[0].mxu0
      %v454 = vadd.f32 %v233, %v453
      %v455 = vpop.f32.mrb[0].mxu0
      %456 = vmatprep.mubr.f32.mxu0 0.0
      %457 = vmatmul.mubr.f32.gmra.mrb[0].mxu0 %v240
      %v458 = vpop.f32.mrb[0].mxu0
      %v459 = vadd.f32 %v233, %v458
      %v460 = vpop.f32.mrb[0].mxu0
      %461 = vmatprep.mubr.f32.mxu0 0.0
      %462 = vmatmul.mubr.f32.gmra.mrb[0].mxu0 %v243
      %v463 = vpop.f32.mrb[0].mxu0
      %v464 = vadd.f32 %v233, %v463
      %v465 = vpop.f32.mrb[0].mxu0
      %466 = vmatprep.mubr.f32.mxu0 0.0
      %467 = vmatmul.mubr.f32.gmra.mrb[0].mxu0 %v246
      %v468 = vpop.f32.mrb[0].mxu0
      %v469 = vadd.f32 %v233, %v468
      %v470 = vpop.f32.mrb[0].mxu0
      %471 = vmatprep.mubr.f32.mxu0 0.0
      %472 = vmatmul.mubr.f32.gmra.mrb[0].mxu0 %v249
      %v473 = vpop.f32.mrb[0].mxu0
      %v474 = vadd.f32 %v233, %v473
      %v475 = vpop.f32.mrb[0].mxu0
      %476 = vmatprep.mubr.f32.mxu0 0.0
      %477 = vmatmul.mubr.f32.gmra.mrb[0].mxu0 %v252
      %v478 = vpop.f32.mrb[0].mxu0
      %v479 = vadd.f32 %v233, %v478
      %v480 = vpop.f32.mrb[0].mxu0
      %481 = vmatprep.mubr.f32.mxu0 0.0
      %482 = vmatmul.mubr.f32.gmra.mrb[0].mxu0 %v255
      %v483 = vpop.f32.mrb[0].mxu0
      %v484 = vadd.f32 %v233, %v483
      %v485 = vpop.f32.mrb[0].mxu0
      %486 = vmatprep.mubr.f32.mxu0 0.0
      %487 = vmatmul.mubr.f32.gmra.mrb[0].mxu0 %v258
      %v488 = vpop.f32.mrb[0].mxu0
      %v489 = vadd.f32 %v233, %v488
      %v490 = vpop.f32.mrb[0].mxu0
      %491 = vmatprep.mubr.f32.mxu0 0.0
      %492 = vmatmul.mubr.f32.gmra.mrb[0].mxu0 %v261
      %v493 = vpop.f32.mrb[0].mxu0
      %v494 = vadd.f32 %v233, %v493
      %v495 = vpop.f32.mrb[0].mxu0
      %496 = vmatprep.mubr.f32.mxu0 0.0
      %497 = vmatmul.mubr.f32.gmra.mrb[0].mxu0 %v264
      %v498 = vpop.f32.mrb[0].mxu0
      %v499 = vadd.f32 %v233, %v498
      %v500 = vpop.f32.mrb[0].mxu0
      %501 = vmatprep.mubr.f32.mxu0 0.0
      %502 = vmatmul.mubr.f32.gmra.mrb[0].mxu0 %v267
      %v503 = vpop.f32.mrb[0].mxu0
      %v504 = vadd.f32 %v233, %v503
      %v505 = vpop.f32.mrb[0].mxu0
      %506 = vmatprep.mubr.f32.mxu0 0.0
      %507 = vmatmul.mubr.f32.gmra.mrb[0].mxu0 %v270
      %v508 = vpop.f32.mrb[0].mxu0
      %v509 = vadd.f32 %v233, %v508
      %v510 = vpop.f32.mrb[0].mxu0
      %511 = vmatprep.mubr.f32.mxu0 0.0
      %512 = vmatmul.mubr.f32.gmra.mrb[0].mxu0 %v273
      %v513 = vpop.f32.mrb[0].mxu0
      %v514 = vadd.f32 %v233, %v513
      %v515 = vpop.f32.mrb[0].mxu0
      %516 = vmatprep.mubr.f32.mxu0 0.0
      %517 = vmatmul.mubr.f32.gmra.mrb[0].mxu0 %v276
      %v518 = vpop.f32.mrb[0].mxu0
      %v519 = vadd.f32 %v233, %v518
      %v520 = vpop.f32.mrb[0].mxu0
      %521 = vmatprep.mubr.f32.mxu0 0.0
      %522 = vmatmul.mubr.f32.gmra.mrb[0].mxu0 %v279
      %v523 = vpop.f32.mrb[0].mxu0
      %v524 = vadd.f32 %v233, %v523
      %v525 = vpop.f32.mrb[0].mxu0
      %526 = vmatprep.mubr.f32.mxu0 0.0
      %527 = vmatmul.mubr.f32.gmra.mrb[0].mxu0 %v282
      %v528 = vpop.f32.mrb[0].mxu0
      %v529 = vadd.f32 %v233, %v528
      %v530 = vpop.f32.mrb[0].mxu0
      %531 = vmatprep.mubr.f32.mxu0 0.0
      %532 = vmatmul.mubr.f32.gmra.mrb[0].mxu0 %v285
      %v533 = vpop.f32.mrb[0].mxu0
      %v534 = vadd.f32 %v233, %v533
      %v535 = vpop.f32.mrb[0].mxu0
      %536 = vmatprep.mubr.f32.mxu0 0.0
      %537 = vmatmul.mubr.f32.gmra.mrb[0].mxu0 %v288
      %v538 = vpop.f32.mrb[0].mxu0
      %v539 = vadd.f32 %v233, %v538
      %v540 = vpop.f32.mrb[0].mxu0
      %541 = vmatprep.mubr.f32.mxu0 0.0
      %542 = vmatmul.mubr.f32.gmra.mrb[0].mxu0 %v291
      %v543 = vpop.f32.mrb[0].mxu0
      %v544 = vadd.f32 %v233, %v543
      %v545 = vpop.f32.mrb[0].mxu0
      %546 = vmatprep.mubr.f32.mxu0 0.0
      %547 = vmatmul.mubr.f32.gmra.mrb[0].mxu0 %v294
      %v548 = vpop.f32.mrb[0].mxu0
      %v549 = vadd.f32 %v233, %v548
      %v550 = vpop.f32.mrb[0].mxu0
      %551 = vmatprep.mubr.f32.mxu0 0.0
      %552 = vmatmul.mubr.f32.gmra.mrb[0].mxu0 %v297
      %v553 = vpop.f32.mrb[0].mxu0
      %v554 = vadd.f32 %v233, %v553
      %v555 = vpop.f32.mrb[0].mxu0
      %556 = vmatprep.mubr.f32.mxu0 0.0
      %557 = vmatmul.mubr.f32.gmra.mrb[0].mxu0 %v300
      %v558 = vpop.f32.mrb[0].mxu0
      %v559 = vadd.f32 %v233, %v558
      %v560 = vpop.f32.mrb[0].mxu0
      %561 = vmatprep.mubr.f32.mxu0 0.0
      %562 = vmatmul.mubr.f32.gmra.mrb[0].mxu0 %v303
      %v563 = vpop.f32.mrb[0].mxu0
      %v564 = vadd.f32 %v233, %v563
      %v565 = vpop.f32.mrb[0].mxu0
      %566 = vmatprep.mubr.f32.mxu0 0.0
      %567 = vmatmul.mubr.f32.gmra.mrb[0].mxu0 %v306
      %v568 = vpop.f32.mrb[0].mxu0
      %v569 = vadd.f32 %v233, %v568
      %v570 = vpop.f32.mrb[0].mxu0
      %571 = vmatprep.mubr.f32.mxu0 0.0
      %572 = vmatmul.mubr.f32.gmra.mrb[0].mxu0 %v309
      %v573 = vpop.f32.mrb[0].mxu0
      %v574 = vadd.f32 %v233, %v573
      %v575 = vpop.f32.mrb[0].mxu0
      %576 = vmatprep.mubr.f32.mxu0 0.0
      %577 = vmatmul.mubr.f32.gmra.mrb[0].mxu0 %v312
      %v578 = vpop.f32.mrb[0].mxu0
      %v579 = vadd.f32 %v233, %v578
      %v580 = vpop.f32.mrb[0].mxu0
      %581 = vmatprep.mubr.f32.mxu0 0.0
      %582 = vmatmul.mubr.f32.gmra.mrb[0].mxu0 %v315
      %v583 = vpop.f32.mrb[0].mxu0
      %v584 = vadd.f32 %v233, %v583
      %v585 = vpop.f32.mrb[0].mxu0
      %586 = vmatprep.mubr.f32.mxu0 0.0
      %587 = vmatmul.mubr.f32.gmra.mrb[0].mxu0 %v318
      %v588 = vpop.f32.mrb[0].mxu0
      %v589 = vadd.f32 %v233, %v588
      %v590 = vpop.f32.mrb[0].mxu0
      %591 = vmatprep.mubr.f32.mxu0 0.0
      %592 = vmatmul.mubr.f32.gmra.mrb[0].mxu0 %v321
      %v593 = vpop.f32.mrb[0].mxu0
      %v594 = vadd.f32 %v233, %v593
      %v595 = vpop.f32.mrb[0].mxu0
      %596 = vmatprep.mubr.f32.mxu0 0.0
      %597 = vmatmul.mubr.f32.gmra.mrb[0].mxu0 %v324
      %v598 = vpop.f32.mrb[0].mxu0
      %v599 = vadd.f32 %v233, %v598
      %v600 = vpop.f32.mrb[0].mxu0
      %601 = vmatprep.mubr.f32.mxu0 0.0
      %602 = vmatmul.mubr.f32.gmra.mrb[0].mxu0 %v327
      %v603 = vpop.f32.mrb[0].mxu0
      %v604 = vadd.f32 %v233, %v603
      %v605 = vpop.f32.mrb[0].mxu0
      %606 = vmatprep.mubr.f32.mxu0 0.0
      %607 = vmatmul.mubr.f32.gmra.mrb[0].mxu0 %v330
      %v608 = vpop.f32.mrb[0].mxu0
      %v609 = vadd.f32 %v233, %v608
      %v610 = vpop.f32.mrb[0].mxu0
      %611 = vmatprep.mubr.f32.mxu0 0.0
      %612 = vmatmul.mubr.f32.gmra.mrb[0].mxu0 %v333
      %v613 = vpop.f32.mrb[0].mxu0
      %v614 = vadd.f32 %v233, %v613
      %v615 = vpop.f32.mrb[0].mxu0
      %616 = vmatprep.mubr.f32.mxu0 0.0
      %617 = vmatmul.mubr.f32.gmra.mrb[0].mxu0 %v336
      %v618 = vpop.f32.mrb[0].mxu0
      %v619 = vadd.f32 %v233, %v618
      %v620 = vpop.f32.mrb[0].mxu0
      %621 = vmatprep.mubr.f32.mxu0 0.0
      %622 = vmatmul.mubr.f32.gmra.mrb[0].mxu0 %v339
      %v623 = vpop.f32.mrb[0].mxu0
      %v624 = vadd.f32 %v233, %v623
      %v625 = vpop.f32.mrb[0].mxu0
      %626 = vmatprep.mubr.f32.mxu0 0.0
      %627 = vmatmul.mubr.f32.gmra.mrb[0].mxu0 %v342
      %v628 = vpop.f32.mrb[0].mxu0
      %v629 = vadd.f32 %v233, %v628
      %v630 = vpop.f32.mrb[0].mxu0
      %631 = vmatprep.mubr.f32.mxu0 0.0
      %632 = vmatmul.mubr.f32.gmra.mrb[0].mxu0 %v345
      %v633 = vpop.f32.mrb[0].mxu0
      %v634 = vadd.f32 %v233, %v633
      %v635 = vpop.f32.mrb[0].mxu0
      %636 = vmatprep.mubr.f32.mxu0 0.0
      %637 = vmatmul.mubr.f32.gmra.mrb[0].mxu0 %v348
      %v638 = vpop.f32.mrb[0].mxu0
      %v639 = vadd.f32 %v233, %v638
      %v640 = vpop.f32.mrb[0].mxu0
      %641 = vmatprep.mubr.f32.mxu0 0.0
      %642 = vmatmul.mubr.f32.gmra.mrb[0].mxu0 %v351
      %v643 = vpop.f32.mrb[0].mxu0
      %v644 = vadd.f32 %v233, %v643
      %v645 = vpop.f32.mrb[0].mxu0
      %646 = vmatprep.mubr.f32.mxu0 0.0
      %647 = vmatmul.mubr.f32.gmra.mrb[0].mxu0 %v354
      %v648 = vpop.f32.mrb[0].mxu0
      %v649 = vadd.f32 %v233, %v648
      %v650 = vpop.f32.mrb[0].mxu0
      %651 = vmatprep.mubr.f32.mxu0 0.0
      %652 = vmatmul.mubr.f32.gmra.mrb[0].mxu0 %v357
      %v653 = vpop.f32.mrb[0].mxu0
      %v654 = vadd.f32 %v233, %v653
      %v655 = vpop.f32.mrb[0].mxu0
      %656 = vmatprep.mubr.f32.mxu0 0.0
      %657 = vmatmul.mubr.f32.gmra.mrb[0].mxu0 %v360
      %v658 = vpop.f32.mrb[0].mxu0
      %v659 = vadd.f32 %v233, %v658
      %v660 = vpop.f32.mrb[0].mxu0
      %661 = vmatprep.mubr.f32.mxu0 0.0
      %662 = vmatmul.mubr.f32.gmra.mrb[0].mxu0 %v363
      %v663 = vpop.f32.mrb[0].mxu0
      %v664 = vadd.f32 %v233, %v663
      %v665 = vpop.f32.mrb[0].mxu0
      %666 = vmatprep.mubr.f32.mxu0 0.0
      %667 = vmatmul.mubr.f32.gmra.mrb[0].mxu0 %v366
      %v668 = vpop.f32.mrb[0].mxu0
      %v669 = vadd.f32 %v233, %v668
      %v670 = vpop.f32.mrb[0].mxu0
      %671 = vmatprep.mubr.f32.mxu0 0.0
      %672 = vmatmul.mubr.f32.gmra.mrb[0].mxu0 %v369
      %v673 = vpop.f32.mrb[0].mxu0
      %v674 = vadd.f32 %v233, %v673
      %v675 = vpop.f32.mrb[0].mxu0
      %676 = vmatprep.mubr.f32.mxu0 0.0
      %677 = vmatmul.mubr.f32.gmra.mrb[0].mxu0 %v372
      %v678 = vpop.f32.mrb[0].mxu0
      %v679 = vadd.f32 %v233, %v678
      %v680 = vpop.f32.mrb[0].mxu0
      %681 = vmatprep.mubr.f32.mxu0 0.0
      %682 = vmatmul.mubr.f32.gmra.mrb[0].mxu0 %v375
      %v683 = vpop.f32.mrb[0].mxu0
      %v684 = vadd.f32 %v233, %v683
      %v685 = vpop.f32.mrb[0].mxu0
      %686 = vmatprep.mubr.f32.mxu0 0.0
      %687 = vmatmul.mubr.f32.gmra.mrb[0].mxu0 %v378
      %v688 = vpop.f32.mrb[0].mxu0
      %v689 = vadd.f32 %v233, %v688
      %v690 = vpop.f32.mrb[0].mxu0
      %691 = vmatprep.mubr.f32.mxu0 0.0
      %692 = vmatmul.mubr.f32.gmra.mrb[0].mxu0 %v381
      %v693 = vpop.f32.mrb[0].mxu0
      %v694 = vadd.f32 %v233, %v693
      %v695 = vpop.f32.mrb[0].mxu0
      %696 = vdwg.mxu0
      %v697 = vmax.f32 %v454, 0.0
      %v698 = vmax.f32 %v459, 0.0
      %v699 = vmax.f32 %v464, 0.0
      %v700 = vmax.f32 %v469, 0.0
      %v701 = vmax.f32 %v474, 0.0
      %v702 = vmax.f32 %v479, 0.0
      %v703 = vmax.f32 %v484, 0.0
      %v704 = vmax.f32 %v489, 0.0
      %v705 = vmax.f32 %v494, 0.0
      %v706 = vmax.f32 %v499, 0.0
      %v707 = vmax.f32 %v504, 0.0
      %v708 = vmax.f32 %v509, 0.0
      %v709 = vmax.f32 %v514, 0.0
      %v710 = vmax.f32 %v519, 0.0
      %v711 = vmax.f32 %v524, 0.0
      %v712 = vmax.f32 %v529, 0.0
      %v713 = vmax.f32 %v534, 0.0
      %v714 = vmax.f32 %v539, 0.0
      %v715 = vmax.f32 %v544, 0.0
      %v716 = vmax.f32 %v549, 0.0
      %v717 = vmax.f32 %v554, 0.0
      %v718 = vmax.f32 %v559, 0.0
      %v719 = vmax.f32 %v564, 0.0
      %v720 = vmax.f32 %v569, 0.0
      %v721 = vmax.f32 %v574, 0.0
      %v722 = vmax.f32 %v579, 0.0
      %v723 = vmax.f32 %v584, 0.0
      %v724 = vmax.f32 %v589, 0.0
      %v725 = vmax.f32 %v594, 0.0
      %v726 = vmax.f32 %v599, 0.0
      %v727 = vmax.f32 %v604, 0.0
      %v728 = vmax.f32 %v609, 0.0
      %v729 = vmax.f32 %v614, 0.0
      %v730 = vmax.f32 %v619, 0.0
      %v731 = vmax.f32 %v624, 0.0
      %v732 = vmax.f32 %v629, 0.0
      %v733 = vmax.f32 %v634, 0.0
      %v734 = vmax.f32 %v639, 0.0
      %v735 = vmax.f32 %v644, 0.0
      %v736 = vmax.f32 %v649, 0.0
      %v737 = vmax.f32 %v654, 0.0
      %v738 = vmax.f32 %v659, 0.0
      %v739 = vmax.f32 %v664, 0.0
      %v740 = vmax.f32 %v669, 0.0
      %v741 = vmax.f32 %v674, 0.0
      %v742 = vmax.f32 %v679, 0.0
      %v743 = vmax.f32 %v684, 0.0
      %v744 = vmax.f32 %v689, 0.0
      %v745 = vmax.f32 %v694, 0.0
      %vm746 = vcmask 64512
      %747 = vst.msk [vmem:[%s172] sm:$0xff] %vm746, %v697
      %748 = vst.msk [vmem:[%s172 + $0x8] sm:$0xff] %vm746, %v698
      %749 = vst.msk [vmem:[%s172 + $0x10] sm:$0xff] %vm746, %v699
      %750 = vst.msk [vmem:[%s172 + $0x18] sm:$0xff] %vm746, %v700
      %751 = vst.msk [vmem:[%s172 + $0x20] sm:$0xff] %vm746, %v701
      %752 = vst.msk [vmem:[%s172 + $0x28] sm:$0xff] %vm746, %v702
      %753 = vst.msk [vmem:[%s172 + $0x30] sm:$0xff] %vm746, %v703
      %754 = vst.msk [vmem:[%s172 + $0x38] sm:$0xff] %vm746, %v704
      %755 = vst.msk [vmem:[%s172 + $0x40] sm:$0xff] %vm746, %v705
      %756 = vst.msk [vmem:[%s172 + $0x48] sm:$0xff] %vm746, %v706
      %757 = vst.msk [vmem:[%s172 + $0x50] sm:$0xff] %vm746, %v707
      %758 = vst.msk [vmem:[%s172 + $0x58] sm:$0xff] %vm746, %v708
      %759 = vst.msk [vmem:[%s172 + $0x60] sm:$0xff] %vm746, %v709
      %760 = vst.msk [vmem:[%s172 + $0x68] sm:$0xff] %vm746, %v710
      %761 = vst.msk [vmem:[%s172 + $0x70] sm:$0xff] %vm746, %v711
      %762 = vst.msk [vmem:[%s172 + $0x78] sm:$0xff] %vm746, %v712
      %763 = vst.msk [vmem:[%s172 + $0x80] sm:$0xff] %vm746, %v713
      %764 = vst.msk [vmem:[%s172 + $0x88] sm:$0xff] %vm746, %v714
      %765 = vst.msk [vmem:[%s172 + $0x90] sm:$0xff] %vm746, %v715
      %766 = vst.msk [vmem:[%s172 + $0x98] sm:$0xff] %vm746, %v716
      %767 = vst.msk [vmem:[%s172 + $0xa0] sm:$0xff] %vm746, %v717
      %768 = vst.msk [vmem:[%s172 + $0xa8] sm:$0xff] %vm746, %v718
      %769 = vst.msk [vmem:[%s172 + $0xb0] sm:$0xff] %vm746, %v719
      %770 = vst.msk [vmem:[%s172 + $0xb8] sm:$0xff] %vm746, %v720
      %771 = vst.msk [vmem:[%s172 + $0xc0] sm:$0xff] %vm746, %v721
      %772 = vst.msk [vmem:[%s172 + $0xc8] sm:$0xff] %vm746, %v722
      %773 = vst.msk [vmem:[%s172 + $0xd0] sm:$0xff] %vm746, %v723
      %774 = vst.msk [vmem:[%s172 + $0xd8] sm:$0xff] %vm746, %v724
      %775 = vst.msk [vmem:[%s172 + $0xe0] sm:$0xff] %vm746, %v725
      %776 = vst.msk [vmem:[%s172 + $0xe8] sm:$0xff] %vm746, %v726
      %777 = vst.msk [vmem:[%s172 + $0xf0] sm:$0xff] %vm746, %v727
      %778 = vst.msk [vmem:[%s172 + $0xf8] sm:$0xff] %vm746, %v728
      %779 = vst.msk [vmem:[%s172 + $0x100] sm:$0xff] %vm746, %v729
      %780 = vst.msk [vmem:[%s172 + $0x108] sm:$0xff] %vm746, %v730
      %781 = vst.msk [vmem:[%s172 + $0x110] sm:$0xff] %vm746, %v731
      %782 = vst.msk [vmem:[%s172 + $0x118] sm:$0xff] %vm746, %v732
      %783 = vst.msk [vmem:[%s172 + $0x120] sm:$0xff] %vm746, %v733
      %784 = vst.msk [vmem:[%s172 + $0x128] sm:$0xff] %vm746, %v734
      %785 = vst.msk [vmem:[%s172 + $0x130] sm:$0xff] %vm746, %v735
      %786 = vst.msk [vmem:[%s172 + $0x138] sm:$0xff] %vm746, %v736
      %787 = vst.msk [vmem:[%s172 + $0x140] sm:$0xff] %vm746, %v737
      %788 = vst.msk [vmem:[%s172 + $0x148] sm:$0xff] %vm746, %v738
      %789 = vst.msk [vmem:[%s172 + $0x150] sm:$0xff] %vm746, %v739
      %790 = vst.msk [vmem:[%s172 + $0x158] sm:$0xff] %vm746, %v740
      %791 = vst.msk [vmem:[%s172 + $0x160] sm:$0xff] %vm746, %v741
      %792 = vst.msk [vmem:[%s172 + $0x168] sm:$0xff] %vm746, %v742
      %793 = vst.msk [vmem:[%s172 + $0x170] sm:$0xff] %vm746, %v743
      %794 = vst.msk [vmem:[%s172 + $0x178] sm:$0xff] %vm746, %v744
      %795 = vst.msk [vmem:[%s172 + $0x180] sm:$0xff] %vm746, %v745
      %s796 = smul.u32 49, %s14
      %p797 = scmp.lt.s32.totalorder %s796, 97
      %s798 = scalar_select %p797, %s796, 97
      %s799 = smul.addr %s798, 8
      %s800 = scalar_lea.vmem %s3, %s799
      // Predicated region
      $region33: #{tpu_custom_call.1} parent=31 // pred_check
        %p801 = pneg %p100
      $region34: #{tpu_custom_call.1} parent=31 // pred_check_branch
        %803 = sbr.rel (%p801) target = $region36
      $region35: #{tpu_custom_call.1} parent=31 // pred_region
        %s804 = smul.u32 49, %s14
      $region36: #{tpu_custom_call.1} parent=31 // pred_fallthru
        _
    $region32: #{tpu_custom_call.1} parent=5 // pred_fallthru
      _
    %p805 = scmp.le.s32.totalorder 2, %s9
    // Predicated region
    $region37: #{tpu_custom_call.1} parent=5 // pred_check
      %p806 = pneg %p805
    $region38: #{tpu_custom_call.1} parent=5 // pred_check_branch
      %808 = sbr.rel (%p806) target = $region40
    $region39: #{tpu_custom_call.1} parent=5 // pred_region
      %s809 = ssub.s32 %s9, 2
      // Predicated region
      $region41: #{tpu_custom_call.1} parent=39 // pred_check
        %p810 = pneg %p106
      $region42: #{tpu_custom_call.1} parent=39 // pred_check_branch
        %812 = sbr.rel (%p810) target = $region44
      $region43: #{tpu_custom_call.1} parent=39 // pred_region
        %s813 = smul.u32 49, %s15
        %p814 = scmp.lt.s32.totalorder %s813, 97
        %s815 = scalar_select %p814, %s813, 97
        %s816 = smul.addr %s815, 8
        %s817 = scalar_lea.vmem %s3, %s816
      $region44: #{tpu_custom_call.1} parent=39 // pred_fallthru
        _
    $region40: #{tpu_custom_call.1} parent=5 // pred_fallthru
      _
  $region6: #{tpu_custom_call.1} parent=0 // loop_footer
    %s13 = sadd.s32 1, %s9
  $region7: #{tpu_custom_call.1} parent=0 // loop_footer_branch
    %8 = sbr.rel target = $region3
  $region8: #{tpu_custom_call.1} parent=0 // loop_exit
    _

</llo_original>
